<compile_context>
chip_gen: v5e
topology: v5e:2x2
jax: 0.10.0
libtpu: 0.0.40
codegen_flags: <defaults>
</compile_context>

<pallas_src>
import math

import jax
import jax.numpy as jnp
from jax.experimental import pallas as pl
from jax.experimental.pallas import tpu as pltpu


def _round_up(a: int, b: int) -> int:
    return (a + b - 1) // b * b


def _proj_bias_kernel(x_ref, w_ref, b_ref, o_ref):
    """Single reduction step: bf16 MXU matmul + bias, straight to the output tile."""
    x = x_ref[...].astype(jnp.bfloat16)           # cast on the VPU, hidden under MXU
    acc = jnp.dot(x, w_ref[...], preferred_element_type=jnp.float32)
    o_ref[...] = (acc + b_ref[...]).astype(o_ref.dtype)


def _proj_bias_acc_kernel(x_ref, w_ref, b_ref, o_ref, acc_ref):
    """Tiled-K path (K > 2048): f32 VMEM accumulator, bias folded into the init."""
    k = pl.program_id(1)

    @pl.when(k == 0)
    def _():
        acc_ref[...] = jnp.broadcast_to(b_ref[...], acc_ref.shape)

    x = x_ref[...].astype(jnp.bfloat16)
    acc_ref[...] += jnp.dot(x, w_ref[...], preferred_element_type=jnp.float32)

    @pl.when(k == pl.num_programs(1) - 1)
    def _():
        o_ref[...] = acc_ref[...].astype(o_ref.dtype)


def patch_embedding_transpose(x, weight, bias, patch_size):
    """x: (B, P, d_model); weight: (d_model, C, ps, ps); bias: (C,).

    Returns (B, C, P_col*ps, P_row*ps), matching the PyTorch module.
    """
    B, P, d_model = x.shape
    ps = int(patch_size)
    C = weight.shape[1]
    P_col = math.isqrt(P)
    P_row = P // P_col
    assert P_col * P_row == P, "patch count must factor into a (P_col, P_row) grid"

    M, K, N = B * P, d_model, C * ps * ps
    out_dtype = jnp.dtype(x.dtype)
    x_itemsize = jnp.dtype(x.dtype).itemsize

    # ---- operand prep (no activation copy: x stays in its original dtype) ----
    x_flat = x.reshape(M, K)
    w_flat = weight.reshape(K, N).astype(jnp.bfloat16)        # weight is tiny
    b_flat = jnp.repeat(bias, ps * ps).reshape(1, N).astype(jnp.float32)

    single_k = K <= 2048
    if single_k:
        tk = K
    else:
        tk = 512
        K_pad = _round_up(K, tk)
        # Zero padding is required on the reduction dim for correctness.
        x_flat = jnp.pad(x_flat, ((0, 0), (0, K_pad - K)))
        w_flat = jnp.pad(w_flat, ((0, K_pad - K), (0, 0)))

    # ---- M tile: as large as the VMEM budget allows; >= 2 blocks for megacore.
    def footprint(tm_):
        x_b = tm_ * tk * x_itemsize
        w_b = tk * N * 2
        o_b = tm_ * N * out_dtype.itemsize
        b_b = N * 4
        acc = 0 if single_k else tm_ * N * 4
        return 2 * (x_b + w_b + o_b + b_b) + acc               # double-buffered I/O

    tm = min(1024, _round_up(M, 8))
    while tm > 8 and footprint(tm) > 24 * 1024 * 1024:
        tm = _round_up(tm // 2, 8)
    if M > 8 and pl.cdiv(M, tm) < 2:                           # give both v7x TCs work
        tm = _round_up(pl.cdiv(M, 2), 8)
    grid_m = pl.cdiv(M, tm)

    cost = pl.CostEstimate(
        flops=2 * M * N * K,
        transcendentals=0,
        bytes_accessed=M * K * x_itemsize + K * N * 2 + N * 4
        + M * N * out_dtype.itemsize,
    )

    if single_k:
        grid = (grid_m,)
        in_specs = [
            pl.BlockSpec((tm, K), lambda i: (i, 0)),
            pl.BlockSpec((K, N), lambda i: (0, 0)),
            pl.BlockSpec((1, N), lambda i: (0, 0)),
        ]
        out_specs = pl.BlockSpec((tm, N), lambda i: (i, 0))
        scratch_shapes = []
        kernel = _proj_bias_kernel
        dims = ("parallel",)
    else:
        grid = (grid_m, x_flat.shape[1] // tk)
        in_specs = [
            pl.BlockSpec((tm, tk), lambda i, k: (i, k)),
            pl.BlockSpec((tk, N), lambda i, k: (k, 0)),
            pl.BlockSpec((1, N), lambda i, k: (0, 0)),
        ]
        out_specs = pl.BlockSpec((tm, N), lambda i, k: (i, 0))
        scratch_shapes = [pltpu.VMEM((tm, N), jnp.float32)]
        kernel = _proj_bias_acc_kernel
        dims = ("parallel", "arbitrary")

    y_flat = pl.pallas_call(
        kernel,
        out_shape=jax.ShapeDtypeStruct((M, N), out_dtype),
        grid_spec=pltpu.PrefetchScalarGridSpec(
            num_scalar_prefetch=0,
            grid=grid,
            in_specs=in_specs,
            out_specs=out_specs,
            scratch_shapes=scratch_shapes,
        ),
        compiler_params=pltpu.CompilerParams(
            dimension_semantics=dims,
            vmem_limit_bytes=32 * 1024 * 1024,
        ),
        cost_estimate=cost,
    )(x_flat, w_flat, b_flat)

    # Un-patchify: single fused XLA transpose (see header note / TODO above).
    y = y_flat.reshape(B, P_col, P_row, C, ps, ps)
    y = jnp.transpose(y, (0, 3, 1, 4, 2, 5))       # (B, C, P_col, ps, P_row, ps)
    return y.reshape(B, C, P_col * ps, P_row * ps)


def _reference(x, weight, bias, patch_size):
    """Pure-JAX reference (same bf16 operand rounding as the kernel)."""
    B, P, d_model = x.shape
    ps = int(patch_size)
    C = weight.shape[1]
    P_col = math.isqrt(P)
    P_row = P // P_col
    xb = x.astype(jnp.bfloat16).astype(jnp.float32)
    wb = weight.astype(jnp.bfloat16).astype(jnp.float32)
    y = jnp.einsum("bpd,dckl->bpckl", xb, wb) \
        + bias.astype(jnp.float32)[None, None, :, None, None]
    y = y.reshape(B, P_col, P_row, C, ps, ps)
    y = jnp.transpose(y, (0, 3, 1, 4, 2, 5))
    return y.reshape(B, C, P_col * ps, P_row * ps).astype(x.dtype)


if __name__ == "__main__":
    # Small shapes consistent with the module:
    #   d_model=32, img_size=16, patch_size=4, n_channels=4
    #   => P = (16/4)^2 = 16 patches, output image (2, 4, 16, 16)
    d_model, img_size, patch_size, n_channels = 32, 16, 4, 4
    B = 2
    P = (img_size // patch_size) ** 2

    key = jax.random.PRNGKey(0)
    kx, kw, kb = jax.random.split(key, 3)

    x = jax.random.normal(kx, (B, P, d_model), dtype=jnp.float32)
    # ConvTranspose2d-shaped parameters: weight (in=d_model, out=n_channels, ps, ps)
    fan = d_model * patch_size * patch_size
    bound = 1.0 / math.sqrt(fan)
    weight = jax.random.uniform(
        kw, (d_model, n_channels, patch_size, patch_size),
        minval=-bound, maxval=bound, dtype=jnp.float32)
    bias = jax.random.uniform(
        kb, (n_channels,), minval=-bound, maxval=bound, dtype=jnp.float32)

    out = patch_embedding_transpose(x, weight, bias, patch_size)
    out = jax.block_until_ready(out)

    ref = _reference(x, weight, bias, patch_size)
    assert out.shape == (B, n_channels, img_size, img_size), out.shape
    assert jnp.allclose(out, ref, atol=1e-4, rtol=1e-3), "mismatch vs reference"

    print("KERNEL_OK")
</pallas_src>

<mosaic_0001>
module attributes {stable_mosaic.version = 11 : i64} {
  func.func @_proj_bias_kernel(%arg0: i32, %arg1: memref<16x32xf32, #tpu.memory_space<vmem>>, %arg2: memref<32x64xbf16, #tpu.memory_space<vmem>>, %arg3: memref<1x64xf32, #tpu.memory_space<vmem>>, %arg4: memref<16x64xf32, #tpu.memory_space<vmem>>) attributes {dimension_semantics = [#tpu.dimension_semantics<parallel>], iteration_bounds = array<i64: 2>, scalar_prefetch = 0 : i64, scratch_operands = 0 : i64, tpu.core_type = #tpu.core_type<tc>, window_params = [{transform_indices = @transform_0, window_bounds = array<i64: 16, 32>}, {pipeline_mode = #tpu.pipeline_mode<synchronous>, transform_indices = @transform_1, window_bounds = array<i64: 32, 64>}, {pipeline_mode = #tpu.pipeline_mode<synchronous>, transform_indices = @transform_2, window_bounds = array<i64: 1, 64>}, {transform_indices = @transform_3, window_bounds = array<i64: 16, 64>}]} {
    %c0 = arith.constant 0 : index
    %c0_0 = arith.constant 0 : index
    %0 = vector.load %arg1[%c0, %c0_0] : memref<16x32xf32, #tpu.memory_space<vmem>>, vector<16x32xf32>
    %1 = arith.truncf %0 : vector<16x32xf32> to vector<16x32xbf16>
    %c0_1 = arith.constant 0 : index
    %c0_2 = arith.constant 0 : index
    %2 = vector.load %arg2[%c0_1, %c0_2] : memref<32x64xbf16, #tpu.memory_space<vmem>>, vector<32x64xbf16>
    %cst = arith.constant dense<0.000000e+00> : vector<16x64xf32>
    %3 = tpu.matmul %1, %2, %cst {dimension_numbers = #tpu.dot_dimension_numbers<[1], [0], [0], [1], [0, 0, 1, 1], [], []>} : vector<16x32xbf16>, vector<32x64xbf16>, vector<16x64xf32> -> vector<16x64xf32>
    %c0_3 = arith.constant 0 : index
    %c0_4 = arith.constant 0 : index
    %4 = vector.load %arg3[%c0_3, %c0_4] : memref<1x64xf32, #tpu.memory_space<vmem>>, vector<1x64xf32>
    %5 = vector.broadcast %4 : vector<1x64xf32> to vector<16x64xf32>
    %6 = arith.addf %3, %5 : vector<16x64xf32>
    %c0_5 = arith.constant 0 : index
    %c0_6 = arith.constant 0 : index
    %7 = vector.load %arg4[%c0_5, %c0_6] : memref<16x64xf32, #tpu.memory_space<vmem>>, vector<16x64xf32>
    tpu.vector_store %arg4[%c0_5, %c0_6], %6 {strides = array<i32>} : memref<16x64xf32, #tpu.memory_space<vmem>>, vector<16x64xf32>,
    return
  }
  func.func @transform_0(%arg0: i32) -> (i32, i32) {
    %c0_i32 = arith.constant 0 : i32
    %c0_i32_0 = arith.constant 0 : i32
    return %arg0, %c0_i32 : i32, i32
  }
  func.func @transform_1(%arg0: i32) -> (i32, i32) {
    %c0_i32 = arith.constant 0 : i32
    %c0_i32_0 = arith.constant 0 : i32
    %c0_i32_1 = arith.constant 0 : i32
    return %c0_i32, %c0_i32_0 : i32, i32
  }
  func.func @transform_2(%arg0: i32) -> (i32, i32) {
    %c0_i32 = arith.constant 0 : i32
    %c0_i32_0 = arith.constant 0 : i32
    %c0_i32_1 = arith.constant 0 : i32
    return %c0_i32, %c0_i32_0 : i32, i32
  }
  func.func @transform_3(%arg0: i32) -> (i32, i32) {
    %c0_i32 = arith.constant 0 : i32
    %c0_i32_0 = arith.constant 0 : i32
    return %arg0, %c0_i32 : i32, i32
  }
}

</mosaic_0001>

<llo_original>
// kernel: tpu_custom_call.1
$region0: #{tpu_custom_call.1}
  #allocation0 [shape = 'u32[]', space=smem, size = 0x4, offset = 0x4, fixed_abs, tag = 'smem constant byte address 0x4 - core index']
  #allocation1 [shape = 'u32[72,128]{1,0:T(1,128)}', space=vmem, size = 0x9000, scoped, tag = 'internal scratch']
  %s0 = inlined_call_operand.hbm [shape: f32[32,32], index: 0, kind: input, shape index: {}]
  %s1 = inlined_call_operand.hbm [shape: bf16[32,64], index: 1, kind: input, shape index: {}]
  %s2 = inlined_call_operand.vmem [shape: f32[1,64], index: 2, kind: input, shape index: {}]
  %s3 = inlined_call_operand.hbm [shape: f32[32,64], index: 3, kind: output, shape index: {}]
  %s4 = sld [smem:[#allocation0]]
  $region53: #{tpu_custom_call.1} parent=0
    _
  %s6 = ssub.s32 1, %s4
  %s7 = scalar_select 0, %s6, %s4
  $region1: #{tpu_custom_call.1} parent=0
    #allocation2 [shape = 'u8[16384]{0}', space=vmem, size = 0x4000, scoped, tag = 'input window, operand 0']
    #allocation3 [shape = 's32[2]{0}', space=sflag, size = 0x8, scoped, tag = 'scoped memory for tpu_custom_call.1']
    #allocation4 [shape = 's32[2]{0}', space=sflag, size = 0x8, scoped, tag = 'scoped memory for tpu_custom_call.1']
    #allocation5 [shape = 'u8[8192]{0}', space=vmem, size = 0x2000, scoped, tag = 'input window, operand 1, single buffered']
    #allocation6 [shape = 's32[1]{0}', space=sflag, size = 0x4, scoped, tag = 'scoped memory for tpu_custom_call.1']
    #allocation7 [shape = 'u8[16384]{0}', space=vmem, size = 0x4000, scoped, tag = 'output window, operand 0']
    %8 = vsyncpa [#allocation3], 0
    %s9 = scalar_lea.sflag [#allocation3], 1
    %10 = vsyncpa %s9, 0
    %11 = vsyncpa [#allocation6], 0
    %12 = vsyncpa [#allocation4], 0
    %s13 = scalar_lea.sflag [#allocation4], 1
    %14 = vsyncpa %s13, 0
    loop: start=0, step=1, limit=4
    $region2: #{tpu_custom_call.1} parent=1 // loop_pre_header
      _
    $region3: #{tpu_custom_call.1} parent=1 // loop_header
      %s16 = sphi 0, %s20
      %p17 = scmp.ge.s32.totalorder %s16, 4
      %s26 = sphi 0, %s28
      %s29 = sphi 0, %s26
      %s30 = sphi 0, %s29
      %s46 = sphi 0, %s30
      %s50 = sphi 0, %s50
      %s52 = sphi 0, %s50
      %s53 = sphi 0, %s52
      %s67 = sphi 0, %s53
      %s71 = sphi 0, %s71
      %s73 = sphi 0, %s71
      %s74 = sphi 0, %s73
      %s88 = sphi 0, %s74
      %s94 = sphi 0, %s96
      %s97 = sphi 0, %s94
      %s98 = sphi 0, %s97
      %s114 = sphi 0, %s98
    $region4: #{tpu_custom_call.1} parent=1 // loop_header_branch
      %19 = sbr.rel (%p17) target = $region8
    $region5: #{tpu_custom_call.1} parent=1 // loop_body
      %s21 = ssub.s32 %s16, 1
      %s22 = ssub.s32 %s16, 2
      %s23 = sadd.s32 %s16, 1
      %s24 = ssub.s32 %s16, %s23
      %p25 = scmp.eq.s32.totalorder %s24, 0
      %s27 = sadd.s32 %s26, 1
      %s28 = scalar_select %p25, %s26, %s27
      %p31 = pneg %p25
      %p32 = scmp.eq.s32.totalorder %s16, 1
      %p33 = por %p31, %p32
      %p34 = scmp.ne.s32.totalorder %s26, %s29
      %p35 = scmp.eq.s32.totalorder %s16, 0
      %p36 = por %p34, %p35
      %p37 = scmp.ne.s32.totalorder %s26, %s29
      %p38 = scmp.eq.s32.totalorder %s21, 1
      %p39 = por %p37, %p38
      %p40 = scmp.ne.s32.totalorder %s29, %s30
      %p41 = scmp.eq.s32.totalorder %s21, 0
      %p42 = por %p40, %p41
      %p43 = scmp.ne.s32.totalorder %s29, %s30
      %p44 = scmp.eq.s32.totalorder %s22, 1
      %p45 = por %p43, %p44
      %p47 = scmp.ne.s32.totalorder %s30, %s46
      %p48 = scmp.eq.s32.totalorder %s22, 0
      %p49 = por %p47, %p48
      %s51 = sadd.s32 %s50, 1
      %p54 = scmp.eq.s32.totalorder %s16, 1
      %p55 = scmp.ne.s32.totalorder %s50, %s52
      %p56 = scmp.eq.s32.totalorder %s16, 0
      %p57 = por %p55, %p56
      %p58 = scmp.ne.s32.totalorder %s50, %s52
      %p59 = scmp.eq.s32.totalorder %s21, 1
      %p60 = por %p58, %p59
      %p61 = scmp.ne.s32.totalorder %s52, %s53
      %p62 = scmp.eq.s32.totalorder %s21, 0
      %p63 = por %p61, %p62
      %p64 = scmp.ne.s32.totalorder %s52, %s53
      %p65 = scmp.eq.s32.totalorder %s22, 1
      %p66 = por %p64, %p65
      %p68 = scmp.ne.s32.totalorder %s53, %s67
      %p69 = scmp.eq.s32.totalorder %s22, 0
      %p70 = por %p68, %p69
      %s72 = sadd.s32 %s71, 1
      %p75 = scmp.eq.s32.totalorder %s16, 1
      %p76 = scmp.ne.s32.totalorder %s71, %s73
      %p77 = scmp.eq.s32.totalorder %s16, 0
      %p78 = por %p76, %p77
      %p79 = scmp.ne.s32.totalorder %s71, %s73
      %p80 = scmp.eq.s32.totalorder %s21, 1
      %p81 = por %p79, %p80
      %p82 = scmp.ne.s32.totalorder %s73, %s74
      %p83 = scmp.eq.s32.totalorder %s21, 0
      %p84 = por %p82, %p83
      %p85 = scmp.ne.s32.totalorder %s73, %s74
      %p86 = scmp.eq.s32.totalorder %s22, 1
      %p87 = por %p85, %p86
      %p89 = scmp.ne.s32.totalorder %s74, %s88
      %p90 = scmp.eq.s32.totalorder %s22, 0
      %p91 = por %p89, %p90
      %s92 = ssub.s32 %s16, %s23
      %p93 = scmp.eq.s32.totalorder %s92, 0
      %s95 = sadd.s32 %s94, 1
      %s96 = scalar_select %p93, %s94, %s95
      %p99 = pneg %p93
      %p100 = scmp.eq.s32.totalorder %s16, 1
      %p101 = por %p99, %p100
      %p102 = scmp.ne.s32.totalorder %s94, %s97
      %p103 = scmp.eq.s32.totalorder %s16, 0
      %p104 = por %p102, %p103
      %p105 = scmp.ne.s32.totalorder %s94, %s97
      %p106 = scmp.eq.s32.totalorder %s21, 1
      %p107 = por %p105, %p106
      %p108 = scmp.ne.s32.totalorder %s97, %s98
      %p109 = scmp.eq.s32.totalorder %s21, 0
      %p110 = por %p108, %p109
      %p111 = scmp.ne.s32.totalorder %s97, %s98
      %p112 = scmp.eq.s32.totalorder %s22, 1
      %p113 = por %p111, %p112
      %p115 = scmp.ne.s32.totalorder %s98, %s114
      %p116 = scmp.eq.s32.totalorder %s22, 0
      %p117 = por %p115, %p116
      %p118 = scmp.le.s32.totalorder 1, %s16
      %p119 = scmp.lt.s32.totalorder %s16, 3
      %p120 = pnand %p118, %p119
      %p121 = pneg %p120
      // Predicated region
      $region9: #{tpu_custom_call.1} parent=5 // pred_check
        _
      $region10: #{tpu_custom_call.1} parent=5 // pred_check_branch
        %123 = sbr.rel (%p120) target = $region12
      $region11: #{tpu_custom_call.1} parent=5 // pred_region
        %s124 = ssub.s32 %s16, 1
        // Predicated region
        $region13: #{tpu_custom_call.1} parent=11 // pred_check
          %p125 = pneg %p63
        $region14: #{tpu_custom_call.1} parent=11 // pred_check_branch
          %127 = sbr.rel (%p125) target = $region16
        $region15: #{tpu_custom_call.1} parent=11 // pred_region
          %129 = vsyncadd [#allocation6], 0
          %s130 = sshll.u32 %s1, 4
          %s131 = int_to_ptr.hbm [resolvable:$true] %s130
          %s132 = sshll.u32 [#allocation5], 4
          %s133 = int_to_ptr.vmem [resolvable:$true] %s132
          %138 = dma.hbm_to_vmem [thread:$0]  %s131, 256, %s133, [#allocation6], 64, 64, 4
        $region16: #{tpu_custom_call.1} parent=11 // pred_fallthru
          _
        // Predicated region
        $region17: #{tpu_custom_call.1} parent=11 // pred_check
          %p139 = pneg %p84
        $region18: #{tpu_custom_call.1} parent=11 // pred_check_branch
          %141 = sbr.rel (%p139) target = $region20
        $region19: #{tpu_custom_call.1} parent=11 // pred_region
          _
        $region20: #{tpu_custom_call.1} parent=11 // pred_fallthru
          _
      $region12: #{tpu_custom_call.1} parent=5 // pred_fallthru
        _
      %p142 = scmp.lt.s32.totalorder %s16, 2
      // Predicated region
      $region21: #{tpu_custom_call.1} parent=5 // pred_check
        %p143 = pneg %p142
      $region22: #{tpu_custom_call.1} parent=5 // pred_check_branch
        %145 = sbr.rel (%p143) target = $region24
      $region23: #{tpu_custom_call.1} parent=5 // pred_region
        // Predicated region
        $region25: #{tpu_custom_call.1} parent=23 // pred_check
          %p146 = pneg %p36
        $region26: #{tpu_custom_call.1} parent=23 // pred_check_branch
          %148 = sbr.rel (%p146) target = $region28
        $region27: #{tpu_custom_call.1} parent=23 // pred_region
          %s149 = sand.u32 %s26, 1
          %s150 = scalar_lea.sflag [#allocation3], %s149
          %s151 = sand.u32 %s26, 1
          %s152 = smul.addr %s151, 16
          %s153 = scalar_lea.vmem [#allocation2], %s152
          %s154 = smul.u32 2, %s16
          %156 = vsyncadd %s150, 0
          %s157 = smul.addr %s154, 8
          %s158 = scalar_lea.hbm %s0, %s157
          %s159 = sshll.u32 %s158, 4
          %s160 = int_to_ptr.hbm [resolvable:$true] %s159
          %s161 = sshll.u32 %s153, 4
          %s162 = int_to_ptr.vmem [resolvable:$true] %s161
          %167 = dma.hbm_to_vmem [thread:$0]  %s160, 256, %s162, %s150, 128, 128, 8
        $region28: #{tpu_custom_call.1} parent=23 // pred_fallthru
          _
      $region24: #{tpu_custom_call.1} parent=5 // pred_fallthru
        _
      %p168 = scmp.le.s32.totalorder 1, %s16
      %p169 = scmp.lt.s32.totalorder %s16, 3
      %p170 = pnand %p168, %p169
      %p171 = pneg %p170
      // Predicated region
      $region29: #{tpu_custom_call.1} parent=5 // pred_check
        _
      $region30: #{tpu_custom_call.1} parent=5 // pred_check_branch
        %173 = sbr.rel (%p170) target = $region32
      $region31: #{tpu_custom_call.1} parent=5 // pred_region
        %s174 = ssub.s32 %s16, 1
        %s175 = sand.u32 %s29, 1
        %s176 = scalar_lea.sflag [#allocation3], %s175
        %s177 = sand.u32 %s29, 1
        %s178 = smul.addr %s177, 16
        %s179 = scalar_lea.vmem [#allocation2], %s178
        // Predicated region
        $region33: #{tpu_custom_call.1} parent=31 // pred_check
          %p180 = pneg %p42
        $region34: #{tpu_custom_call.1} parent=31 // pred_check_branch
          %182 = sbr.rel (%p180) target = $region36
        $region35: #{tpu_custom_call.1} parent=31 // pred_region
          %184 = dma.done %s176, 256
        $region36: #{tpu_custom_call.1} parent=31 // pred_fallthru
          _
        // Predicated region
        $region37: #{tpu_custom_call.1} parent=31 // pred_check
          %p185 = pneg %p63
        $region38: #{tpu_custom_call.1} parent=31 // pred_check_branch
          %187 = sbr.rel (%p185) target = $region40
        $region39: #{tpu_custom_call.1} parent=31 // pred_region
          %189 = dma.done [#allocation6], 256
        $region40: #{tpu_custom_call.1} parent=31 // pred_fallthru
          _
        %s190 = sand.u32 %s29, 1
        %s191 = scalar_lea.sflag [#allocation3], %s190
        %s192 = sand.u32 %s29, 1
        %s193 = smul.addr %s192, 16
        %s194 = scalar_lea.vmem [#allocation2], %s193
        %p195 = pneg %p42
        %p196 = pneg %p39
        %p197 = pneg %p63
        %p198 = pneg %p60
        %p199 = pneg %p84
        %p200 = pneg %p81
        %p201 = pneg %p110
        %p202 = pneg %p107
        %s203 = sand.u32 %s97, 1
        %s204 = scalar_lea.sflag [#allocation4], %s203
        %s205 = sand.u32 %s97, 1
        %s206 = smul.addr %s205, 16
        %s207 = scalar_lea.vmem [#allocation7], %s206
        %s208 = smul.u32 2, %s21
        %s209 = smul.u32 2, %s21
        %v211 = vld [vmem:[%s179] sm:$0xff]
        %v212 = vld [vmem:[%s179 + $0x8] sm:$0xff]
        %v213 = vpack.c.bf16 %v212, %v211
        %v214 = vld [vmem:[#allocation5] sm:$0xf]
        %v215 = vld [vmem:[#allocation5 + $0x4] sm:$0xf]
        %v216 = vld [vmem:[#allocation5 + $0x8] sm:$0xf]
        %v217 = vld [vmem:[#allocation5 + $0xc] sm:$0xf]
        %v218 = vld [vmem:[%s2] sm:$0x1]
        %v220 = vperm.slane %v218, 0
        %v226 = vunpack.c.l.b16 %v214
        %v227 = vunpack.c.l.b16 %v215
        %v228 = vunpack.c.l.b16 %v216
        %v229 = vunpack.c.l.b16 %v217
        %v230 = vpack.c.b16 %v227, %v226
        %v231 = vpack.c.b16 %v229, %v228
        %vm234 = vcmask 261120
        %v236 = vsel %vm234, %v213, 0
        %238 = vmatpush.bf16.msra.mxu0 0
        %239 = vmatpush.bf16.msra.mxu0 0
        %240 = vmatpush.bf16.msra.mxu0 0
        %241 = vmatpush.bf16.msra.mxu0 0
        %242 = vmatpush.bf16.msra.mxu0 0
        %243 = vmatpush.bf16.msra.mxu0 0
        %244 = vmatpush.bf16.msra.mxu0 %v231
        %245 = vmatpush.bf16.msra.mxu0 %v230
        %246 = vmatmul.bf16.gmra.mxu0 %v236
        %v247 = vpop.f32.mrf.mxu0
        %v248 = vadd.f32 %v220, %v247
        %v249 = vpop.f32.mrf.mxu0
        %v250 = vadd.f32 %v220, %v249
        %251 = vdwg.mxu0
        %vm252 = vcmask 523264
        %253 = vst.msk [vmem:[%s207] sm:$0xff] %vm252, %v248
        %254 = vst.msk [vmem:[%s207 + $0x8] sm:$0xff] %vm252, %v250
        %s255 = sand.u32 %s97, 1
        %s256 = scalar_lea.sflag [#allocation4], %s255
        %s257 = sand.u32 %s97, 1
        %s258 = smul.addr %s257, 16
        %s259 = scalar_lea.vmem [#allocation7], %s258
        // Predicated region
        $region41: #{tpu_custom_call.1} parent=31 // pred_check
          %p260 = pneg %p107
        $region42: #{tpu_custom_call.1} parent=31 // pred_check_branch
          %262 = sbr.rel (%p260) target = $region44
        $region43: #{tpu_custom_call.1} parent=31 // pred_region
          %s263 = smul.u32 2, %s21
          %265 = vsyncadd %s256, 0
          %s266 = smul.addr %s263, 8
          %s267 = scalar_lea.hbm %s3, %s266
          %s268 = sshll.u32 %s259, 4
          %s269 = int_to_ptr.vmem [resolvable:$true] %s268
          %s270 = sshll.u32 %s267, 4
          %s271 = int_to_ptr.hbm [resolvable:$true] %s270
          %276 = dma.vmem_to_hbm [thread:$0]  %s269, 256, %s271, %s256, 128, 128, 8
        $region44: #{tpu_custom_call.1} parent=31 // pred_fallthru
          _
      $region32: #{tpu_custom_call.1} parent=5 // pred_fallthru
        _
      %p277 = scmp.le.s32.totalorder 2, %s16
      // Predicated region
      $region45: #{tpu_custom_call.1} parent=5 // pred_check
        %p278 = pneg %p277
      $region46: #{tpu_custom_call.1} parent=5 // pred_check_branch
        %280 = sbr.rel (%p278) target = $region48
      $region47: #{tpu_custom_call.1} parent=5 // pred_region
        %s281 = ssub.s32 %s16, 2
        // Predicated region
        $region49: #{tpu_custom_call.1} parent=47 // pred_check
          %p282 = pneg %p113
        $region50: #{tpu_custom_call.1} parent=47 // pred_check_branch
          %284 = sbr.rel (%p282) target = $region52
        $region51: #{tpu_custom_call.1} parent=47 // pred_region
          %s285 = sand.u32 %s98, 1
          %s286 = scalar_lea.sflag [#allocation4], %s285
          %s287 = sand.u32 %s98, 1
          %s288 = smul.addr %s287, 16
          %s289 = scalar_lea.vmem [#allocation7], %s288
          %291 = dma.done %s286, 256
        $region52: #{tpu_custom_call.1} parent=47 // pred_fallthru
          _
      $region48: #{tpu_custom_call.1} parent=5 // pred_fallthru
        _
    $region6: #{tpu_custom_call.1} parent=1 // loop_footer
      %s20 = sadd.s32 1, %s16
    $region7: #{tpu_custom_call.1} parent=1 // loop_footer_branch
      %15 = sbr.rel target = $region3
    $region8: #{tpu_custom_call.1} parent=1 // loop_exit
      _
    %292 = vsyncpa [#allocation3], 1
    %s293 = scalar_lea.sflag [#allocation3], 1
    %294 = vsyncpa %s293, 1
    %295 = vsyncpa [#allocation6], 1
    %296 = vsyncpa [#allocation4], 1
    %s297 = scalar_lea.sflag [#allocation4], 1
    %298 = vsyncpa %s297, 1

</llo_original>
